<compile_context>
chip_gen: v5e
topology: v5e:2x2
jax: 0.10.0
libtpu: 0.0.40
codegen_flags: <defaults>
</compile_context>

<pallas_src>
import numpy as np
import jax
import jax.numpy as jnp
from jax import lax
from jax.experimental import pallas as pl
from jax.experimental.pallas import tpu as pltpu

C_IN = 3
C_OUT = 8
KH = KW = 3
REPLICAS = 4                      # the x4 dim=0 replication of v7
INV_SQRT2 = 0.7071067811865476


def _lane_shift(x, delta):
    """out[..., i] = x[..., (i + delta) % n] for static integer delta."""
    n = x.shape[-1]
    d = delta % n
    if d == 0:
        return x
    return jnp.concatenate([x[..., d:], x[..., :d]], axis=-1)


@jax.jit
def model_forward(x, w, b):
    N, c_in, H, W = x.shape
    assert c_in == C_IN
    HW = H * W

    # Layout plumbing (contiguous reshapes — essentially free under jit).
    x_flat = x.reshape(N, C_IN, HW)                  # (N, 3, 256)
    w_flat = w.reshape(C_OUT, C_IN * KH * KW)        # (8, 27), co on sublanes
    b_col = b.reshape(C_OUT, 1)                      # (8, 1)

    # Constant border masks: masks[ky*KW+kx, h*W+w] = 1 iff tap (ky,kx) reads
    # inside the image (the zero-padding halo contributes 0).  Built with
    # numpy at trace time -> a jit constant, no runtime wrapper op.
    m = np.zeros((KH * KW, HW), np.float32)
    hh, ww = np.meshgrid(np.arange(H), np.arange(W), indexing="ij")
    for ky in range(KH):
        for kx in range(KW):
            ok = ((hh + ky - 1 >= 0) & (hh + ky - 1 < H) &
                  (ww + kx - 1 >= 0) & (ww + kx - 1 < W))
            m[ky * KW + kx] = ok.reshape(-1).astype(np.float32)
    masks = jnp.asarray(m)                           # (9, 256)

    def kernel(x_ref, w_ref, b_ref, m_ref, out_ref):
        # x_ref  : (1, C_IN, HW)              one batch element, flattened
        # w_ref  : (C_OUT, C_IN*KH*KW)        conv weights, co on sublanes
        # b_ref  : (C_OUT, 1)                 conv bias
        # m_ref  : (KH*KW, HW)                border masks
        # out_ref: (REPLICAS, 1, 2*C_OUT, HW) ch[0:8]=v6, ch[8:16]=v1
        xall = x_ref[0]                                   # (C_IN, HW)
        wall = w_ref[...]                                 # (C_OUT, 27)
        mall = m_ref[...]                                 # (9, HW)
        acc = jnp.broadcast_to(b_ref[...], (C_OUT, HW))   # bias-initialised acc

        for ky in range(KH):
            for kx in range(KW):
                tap = ky * KW + kx
                delta = (ky - 1) * W + (kx - 1)           # flat-index shift of tap
                shifted = _lane_shift(xall, delta)        # (C_IN, HW)
                masked = shifted * mall[tap:tap + 1, :]   # zero the padding halo
                for ci in range(C_IN):
                    col = ci * KH * KW + tap
                    wt = wall[:, col:col + 1]             # (C_OUT, 1)
                    acc = acc + wt * masked[ci:ci + 1, :] # (8,1)*(1,256) -> (8,256)

        v1 = acc
        v6 = (0.5 * v1) * (lax.erf(v1 * INV_SQRT2) + 1.0)
        both = jnp.concatenate([v6, v1], axis=0)          # cat dim=1 -> (16, 256)
        for r in range(REPLICAS):                         # v7: x4 cat = store fan-out
            out_ref[r, 0, :, :] = both

    out = pl.pallas_call(
        kernel,
        out_shape=jax.ShapeDtypeStruct((REPLICAS, N, 2 * C_OUT, HW), jnp.float32),
        grid_spec=pltpu.PrefetchScalarGridSpec(
            num_scalar_prefetch=0,
            grid=(N,),                                    # real work per step (one n)
            in_specs=[
                pl.BlockSpec((1, C_IN, HW), lambda n: (n, 0, 0)),
                pl.BlockSpec((C_OUT, C_IN * KH * KW), lambda n: (0, 0)),
                pl.BlockSpec((C_OUT, 1), lambda n: (0, 0)),
                pl.BlockSpec((KH * KW, HW), lambda n: (0, 0)),
            ],
            out_specs=pl.BlockSpec((REPLICAS, 1, 2 * C_OUT, HW),
                                   lambda n: (0, n, 0, 0)),
        ),
        compiler_params=pltpu.CompilerParams(
            # On v7x, switch to (pltpu.CORE_PARALLEL,) to shard n across both TCs.
            dimension_semantics=("parallel",)),
    )(x_flat, w_flat, b_col, masks)

    # Contiguous reshape back to NCHW — free, no transpose needed.
    out = out.reshape(REPLICAS * N, 2 * C_OUT, H, W)

    # TODO(synk): v8/v9/v10 of the original forward raise RuntimeError in
    # PyTorch (cat of 16-channel v7 with 8-channel v1 along dim 0/2/3 has
    # mismatched non-cat dims), so the runnable semantics end at v7.
    return out


def _reference(x, w, b):
    v1 = lax.conv_general_dilated(
        x, w, window_strides=(1, 1), padding=((1, 1), (1, 1)),
        dimension_numbers=("NCHW", "OIHW", "NCHW")) + b[None, :, None, None]
    v6 = (v1 * 0.5) * (lax.erf(v1 * INV_SQRT2) + 1.0)
    inner = jnp.concatenate([v6, v1], axis=1)
    return jnp.concatenate([inner] * REPLICAS, axis=0)


if __name__ == "__main__":
    key = jax.random.PRNGKey(0)
    kx, kw, kb = jax.random.split(key, 3)

    N, H, W = 2, 16, 16
    x = jax.random.normal(kx, (N, C_IN, H, W), dtype=jnp.float32)

    # Deterministic Conv2d(3, 8, 3) parameter init (PyTorch-style uniform).
    fan_in = C_IN * KH * KW
    bound = 1.0 / (fan_in ** 0.5)
    w = jax.random.uniform(kw, (C_OUT, C_IN, KH, KW), jnp.float32, -bound, bound)
    b = jax.random.uniform(kb, (C_OUT,), jnp.float32, -bound, bound)

    out = jax.block_until_ready(model_forward(x, w, b))

    ref = _reference(x, w, b)
    assert out.shape == (REPLICAS * N, 2 * C_OUT, H, W)
    assert jnp.allclose(out, ref, atol=1e-4, rtol=1e-4)
    print("KERNEL_OK")
</pallas_src>

<mosaic_0001>
module attributes {stable_mosaic.version = 11 : i64} {
  func.func @kernel(%arg0: i32, %arg1: memref<1x3x256xf32, #tpu.memory_space<vmem>>, %arg2: memref<8x27xf32, #tpu.memory_space<vmem>>, %arg3: memref<8x1xf32, #tpu.memory_space<vmem>>, %arg4: memref<9x256xf32, #tpu.memory_space<vmem>>, %arg5: memref<4x1x16x256xf32, #tpu.memory_space<vmem>>) attributes {dimension_semantics = [#tpu.dimension_semantics<parallel>], iteration_bounds = array<i64: 2>, scalar_prefetch = 0 : i64, scratch_operands = 0 : i64, tpu.core_type = #tpu.core_type<tc>, window_params = [{transform_indices = @transform_0, window_bounds = array<i64: 1, 3, 256>}, {pipeline_mode = #tpu.pipeline_mode<synchronous>, transform_indices = @transform_1, window_bounds = array<i64: 8, 27>}, {pipeline_mode = #tpu.pipeline_mode<synchronous>, transform_indices = @transform_2, window_bounds = array<i64: 8, 1>}, {pipeline_mode = #tpu.pipeline_mode<synchronous>, transform_indices = @transform_3, window_bounds = array<i64: 9, 256>}, {transform_indices = @transform_4, window_bounds = array<i64: 4, 1, 16, 256>}]} {
    %c0 = arith.constant 0 : index
    %c0_0 = arith.constant 0 : index
    %c0_1 = arith.constant 0 : index
    %0 = vector.load %arg1[%c0, %c0_0, %c0_1] : memref<1x3x256xf32, #tpu.memory_space<vmem>>, vector<1x3x256xf32>
    %1 = vector.shape_cast %0 : vector<1x3x256xf32> to vector<3x256xf32>
    %c0_2 = arith.constant 0 : index
    %c0_3 = arith.constant 0 : index
    %2 = vector.load %arg2[%c0_2, %c0_3] : memref<8x27xf32, #tpu.memory_space<vmem>>, vector<8x27xf32>
    %c0_4 = arith.constant 0 : index
    %c0_5 = arith.constant 0 : index
    %3 = vector.load %arg4[%c0_4, %c0_5] : memref<9x256xf32, #tpu.memory_space<vmem>>, vector<9x256xf32>
    %c0_6 = arith.constant 0 : index
    %c0_7 = arith.constant 0 : index
    %4 = vector.load %arg3[%c0_6, %c0_7] : memref<8x1xf32, #tpu.memory_space<vmem>>, vector<8x1xf32>
    %5 = vector.shape_cast %4 : vector<8x1xf32> to vector<8x1xf32>
    %6 = vector.broadcast %5 : vector<8x1xf32> to vector<8x256xf32>
    %7 = vector.extract_strided_slice %1 {offsets = [0, 239], sizes = [3, 17], strides = [1, 1]} : vector<3x256xf32> to vector<3x17xf32>
    %8 = vector.extract_strided_slice %1 {offsets = [0, 0], sizes = [3, 239], strides = [1, 1]} : vector<3x256xf32> to vector<3x239xf32>
    %9 = tpu.concatenate %7, %8 in 1 : vector<3x17xf32>, vector<3x239xf32> -> vector<3x256xf32>
    %10 = vector.extract_strided_slice %3 {offsets = [0, 0], sizes = [1, 256], strides = [1, 1]} : vector<9x256xf32> to vector<1x256xf32>
    %11 = vector.broadcast %10 : vector<1x256xf32> to vector<3x256xf32>
    %12 = arith.mulf %9, %11 : vector<3x256xf32>
    %13 = vector.extract_strided_slice %2 {offsets = [0, 0], sizes = [8, 1], strides = [1, 1]} : vector<8x27xf32> to vector<8x1xf32>
    %14 = vector.extract_strided_slice %12 {offsets = [0, 0], sizes = [1, 256], strides = [1, 1]} : vector<3x256xf32> to vector<1x256xf32>
    %15 = vector.broadcast %13 : vector<8x1xf32> to vector<8x256xf32>
    %16 = vector.broadcast %14 : vector<1x256xf32> to vector<8x256xf32>
    %17 = arith.mulf %15, %16 : vector<8x256xf32>
    %18 = arith.addf %6, %17 : vector<8x256xf32>
    %19 = vector.extract_strided_slice %2 {offsets = [0, 9], sizes = [8, 1], strides = [1, 1]} : vector<8x27xf32> to vector<8x1xf32>
    %20 = vector.extract_strided_slice %12 {offsets = [1, 0], sizes = [1, 256], strides = [1, 1]} : vector<3x256xf32> to vector<1x256xf32>
    %21 = vector.broadcast %19 : vector<8x1xf32> to vector<8x256xf32>
    %22 = vector.broadcast %20 : vector<1x256xf32> to vector<8x256xf32>
    %23 = arith.mulf %21, %22 : vector<8x256xf32>
    %24 = arith.addf %18, %23 : vector<8x256xf32>
    %25 = vector.extract_strided_slice %2 {offsets = [0, 18], sizes = [8, 1], strides = [1, 1]} : vector<8x27xf32> to vector<8x1xf32>
    %26 = vector.extract_strided_slice %12 {offsets = [2, 0], sizes = [1, 256], strides = [1, 1]} : vector<3x256xf32> to vector<1x256xf32>
    %27 = vector.broadcast %25 : vector<8x1xf32> to vector<8x256xf32>
    %28 = vector.broadcast %26 : vector<1x256xf32> to vector<8x256xf32>
    %29 = arith.mulf %27, %28 : vector<8x256xf32>
    %30 = arith.addf %24, %29 : vector<8x256xf32>
    %31 = vector.extract_strided_slice %1 {offsets = [0, 240], sizes = [3, 16], strides = [1, 1]} : vector<3x256xf32> to vector<3x16xf32>
    %32 = vector.extract_strided_slice %1 {offsets = [0, 0], sizes = [3, 240], strides = [1, 1]} : vector<3x256xf32> to vector<3x240xf32>
    %33 = tpu.concatenate %31, %32 in 1 : vector<3x16xf32>, vector<3x240xf32> -> vector<3x256xf32>
    %34 = vector.extract_strided_slice %3 {offsets = [1, 0], sizes = [1, 256], strides = [1, 1]} : vector<9x256xf32> to vector<1x256xf32>
    %35 = vector.broadcast %34 : vector<1x256xf32> to vector<3x256xf32>
    %36 = arith.mulf %33, %35 : vector<3x256xf32>
    %37 = vector.extract_strided_slice %2 {offsets = [0, 1], sizes = [8, 1], strides = [1, 1]} : vector<8x27xf32> to vector<8x1xf32>
    %38 = vector.extract_strided_slice %36 {offsets = [0, 0], sizes = [1, 256], strides = [1, 1]} : vector<3x256xf32> to vector<1x256xf32>
    %39 = vector.broadcast %37 : vector<8x1xf32> to vector<8x256xf32>
    %40 = vector.broadcast %38 : vector<1x256xf32> to vector<8x256xf32>
    %41 = arith.mulf %39, %40 : vector<8x256xf32>
    %42 = arith.addf %30, %41 : vector<8x256xf32>
    %43 = vector.extract_strided_slice %2 {offsets = [0, 10], sizes = [8, 1], strides = [1, 1]} : vector<8x27xf32> to vector<8x1xf32>
    %44 = vector.extract_strided_slice %36 {offsets = [1, 0], sizes = [1, 256], strides = [1, 1]} : vector<3x256xf32> to vector<1x256xf32>
    %45 = vector.broadcast %43 : vector<8x1xf32> to vector<8x256xf32>
    %46 = vector.broadcast %44 : vector<1x256xf32> to vector<8x256xf32>
    %47 = arith.mulf %45, %46 : vector<8x256xf32>
    %48 = arith.addf %42, %47 : vector<8x256xf32>
    %49 = vector.extract_strided_slice %2 {offsets = [0, 19], sizes = [8, 1], strides = [1, 1]} : vector<8x27xf32> to vector<8x1xf32>
    %50 = vector.extract_strided_slice %36 {offsets = [2, 0], sizes = [1, 256], strides = [1, 1]} : vector<3x256xf32> to vector<1x256xf32>
    %51 = vector.broadcast %49 : vector<8x1xf32> to vector<8x256xf32>
    %52 = vector.broadcast %50 : vector<1x256xf32> to vector<8x256xf32>
    %53 = arith.mulf %51, %52 : vector<8x256xf32>
    %54 = arith.addf %48, %53 : vector<8x256xf32>
    %55 = vector.extract_strided_slice %1 {offsets = [0, 241], sizes = [3, 15], strides = [1, 1]} : vector<3x256xf32> to vector<3x15xf32>
    %56 = vector.extract_strided_slice %1 {offsets = [0, 0], sizes = [3, 241], strides = [1, 1]} : vector<3x256xf32> to vector<3x241xf32>
    %57 = tpu.concatenate %55, %56 in 1 : vector<3x15xf32>, vector<3x241xf32> -> vector<3x256xf32>
    %58 = vector.extract_strided_slice %3 {offsets = [2, 0], sizes = [1, 256], strides = [1, 1]} : vector<9x256xf32> to vector<1x256xf32>
    %59 = vector.broadcast %58 : vector<1x256xf32> to vector<3x256xf32>
    %60 = arith.mulf %57, %59 : vector<3x256xf32>
    %61 = vector.extract_strided_slice %2 {offsets = [0, 2], sizes = [8, 1], strides = [1, 1]} : vector<8x27xf32> to vector<8x1xf32>
    %62 = vector.extract_strided_slice %60 {offsets = [0, 0], sizes = [1, 256], strides = [1, 1]} : vector<3x256xf32> to vector<1x256xf32>
    %63 = vector.broadcast %61 : vector<8x1xf32> to vector<8x256xf32>
    %64 = vector.broadcast %62 : vector<1x256xf32> to vector<8x256xf32>
    %65 = arith.mulf %63, %64 : vector<8x256xf32>
    %66 = arith.addf %54, %65 : vector<8x256xf32>
    %67 = vector.extract_strided_slice %2 {offsets = [0, 11], sizes = [8, 1], strides = [1, 1]} : vector<8x27xf32> to vector<8x1xf32>
    %68 = vector.extract_strided_slice %60 {offsets = [1, 0], sizes = [1, 256], strides = [1, 1]} : vector<3x256xf32> to vector<1x256xf32>
    %69 = vector.broadcast %67 : vector<8x1xf32> to vector<8x256xf32>
    %70 = vector.broadcast %68 : vector<1x256xf32> to vector<8x256xf32>
    %71 = arith.mulf %69, %70 : vector<8x256xf32>
    %72 = arith.addf %66, %71 : vector<8x256xf32>
    %73 = vector.extract_strided_slice %2 {offsets = [0, 20], sizes = [8, 1], strides = [1, 1]} : vector<8x27xf32> to vector<8x1xf32>
    %74 = vector.extract_strided_slice %60 {offsets = [2, 0], sizes = [1, 256], strides = [1, 1]} : vector<3x256xf32> to vector<1x256xf32>
    %75 = vector.broadcast %73 : vector<8x1xf32> to vector<8x256xf32>
    %76 = vector.broadcast %74 : vector<1x256xf32> to vector<8x256xf32>
    %77 = arith.mulf %75, %76 : vector<8x256xf32>
    %78 = arith.addf %72, %77 : vector<8x256xf32>
    %79 = vector.extract_strided_slice %1 {offsets = [0, 255], sizes = [3, 1], strides = [1, 1]} : vector<3x256xf32> to vector<3x1xf32>
    %80 = vector.extract_strided_slice %1 {offsets = [0, 0], sizes = [3, 255], strides = [1, 1]} : vector<3x256xf32> to vector<3x255xf32>
    %81 = tpu.concatenate %79, %80 in 1 : vector<3x1xf32>, vector<3x255xf32> -> vector<3x256xf32>
    %82 = vector.extract_strided_slice %3 {offsets = [3, 0], sizes = [1, 256], strides = [1, 1]} : vector<9x256xf32> to vector<1x256xf32>
    %83 = vector.broadcast %82 : vector<1x256xf32> to vector<3x256xf32>
    %84 = arith.mulf %81, %83 : vector<3x256xf32>
    %85 = vector.extract_strided_slice %2 {offsets = [0, 3], sizes = [8, 1], strides = [1, 1]} : vector<8x27xf32> to vector<8x1xf32>
    %86 = vector.extract_strided_slice %84 {offsets = [0, 0], sizes = [1, 256], strides = [1, 1]} : vector<3x256xf32> to vector<1x256xf32>
    %87 = vector.broadcast %85 : vector<8x1xf32> to vector<8x256xf32>
    %88 = vector.broadcast %86 : vector<1x256xf32> to vector<8x256xf32>
    %89 = arith.mulf %87, %88 : vector<8x256xf32>
    %90 = arith.addf %78, %89 : vector<8x256xf32>
    %91 = vector.extract_strided_slice %2 {offsets = [0, 12], sizes = [8, 1], strides = [1, 1]} : vector<8x27xf32> to vector<8x1xf32>
    %92 = vector.extract_strided_slice %84 {offsets = [1, 0], sizes = [1, 256], strides = [1, 1]} : vector<3x256xf32> to vector<1x256xf32>
    %93 = vector.broadcast %91 : vector<8x1xf32> to vector<8x256xf32>
    %94 = vector.broadcast %92 : vector<1x256xf32> to vector<8x256xf32>
    %95 = arith.mulf %93, %94 : vector<8x256xf32>
    %96 = arith.addf %90, %95 : vector<8x256xf32>
    %97 = vector.extract_strided_slice %2 {offsets = [0, 21], sizes = [8, 1], strides = [1, 1]} : vector<8x27xf32> to vector<8x1xf32>
    %98 = vector.extract_strided_slice %84 {offsets = [2, 0], sizes = [1, 256], strides = [1, 1]} : vector<3x256xf32> to vector<1x256xf32>
    %99 = vector.broadcast %97 : vector<8x1xf32> to vector<8x256xf32>
    %100 = vector.broadcast %98 : vector<1x256xf32> to vector<8x256xf32>
    %101 = arith.mulf %99, %100 : vector<8x256xf32>
    %102 = arith.addf %96, %101 : vector<8x256xf32>
    %103 = vector.extract_strided_slice %3 {offsets = [4, 0], sizes = [1, 256], strides = [1, 1]} : vector<9x256xf32> to vector<1x256xf32>
    %104 = vector.broadcast %103 : vector<1x256xf32> to vector<3x256xf32>
    %105 = arith.mulf %1, %104 : vector<3x256xf32>
    %106 = vector.extract_strided_slice %2 {offsets = [0, 4], sizes = [8, 1], strides = [1, 1]} : vector<8x27xf32> to vector<8x1xf32>
    %107 = vector.extract_strided_slice %105 {offsets = [0, 0], sizes = [1, 256], strides = [1, 1]} : vector<3x256xf32> to vector<1x256xf32>
    %108 = vector.broadcast %106 : vector<8x1xf32> to vector<8x256xf32>
    %109 = vector.broadcast %107 : vector<1x256xf32> to vector<8x256xf32>
    %110 = arith.mulf %108, %109 : vector<8x256xf32>
    %111 = arith.addf %102, %110 : vector<8x256xf32>
    %112 = vector.extract_strided_slice %2 {offsets = [0, 13], sizes = [8, 1], strides = [1, 1]} : vector<8x27xf32> to vector<8x1xf32>
    %113 = vector.extract_strided_slice %105 {offsets = [1, 0], sizes = [1, 256], strides = [1, 1]} : vector<3x256xf32> to vector<1x256xf32>
    %114 = vector.broadcast %112 : vector<8x1xf32> to vector<8x256xf32>
    %115 = vector.broadcast %113 : vector<1x256xf32> to vector<8x256xf32>
    %116 = arith.mulf %114, %115 : vector<8x256xf32>
    %117 = arith.addf %111, %116 : vector<8x256xf32>
    %118 = vector.extract_strided_slice %2 {offsets = [0, 22], sizes = [8, 1], strides = [1, 1]} : vector<8x27xf32> to vector<8x1xf32>
    %119 = vector.extract_strided_slice %105 {offsets = [2, 0], sizes = [1, 256], strides = [1, 1]} : vector<3x256xf32> to vector<1x256xf32>
    %120 = vector.broadcast %118 : vector<8x1xf32> to vector<8x256xf32>
    %121 = vector.broadcast %119 : vector<1x256xf32> to vector<8x256xf32>
    %122 = arith.mulf %120, %121 : vector<8x256xf32>
    %123 = arith.addf %117, %122 : vector<8x256xf32>
    %124 = vector.extract_strided_slice %1 {offsets = [0, 1], sizes = [3, 255], strides = [1, 1]} : vector<3x256xf32> to vector<3x255xf32>
    %125 = vector.extract_strided_slice %1 {offsets = [0, 0], sizes = [3, 1], strides = [1, 1]} : vector<3x256xf32> to vector<3x1xf32>
    %126 = tpu.concatenate %124, %125 in 1 : vector<3x255xf32>, vector<3x1xf32> -> vector<3x256xf32>
    %127 = vector.extract_strided_slice %3 {offsets = [5, 0], sizes = [1, 256], strides = [1, 1]} : vector<9x256xf32> to vector<1x256xf32>
    %128 = vector.broadcast %127 : vector<1x256xf32> to vector<3x256xf32>
    %129 = arith.mulf %126, %128 : vector<3x256xf32>
    %130 = vector.extract_strided_slice %2 {offsets = [0, 5], sizes = [8, 1], strides = [1, 1]} : vector<8x27xf32> to vector<8x1xf32>
    %131 = vector.extract_strided_slice %129 {offsets = [0, 0], sizes = [1, 256], strides = [1, 1]} : vector<3x256xf32> to vector<1x256xf32>
    %132 = vector.broadcast %130 : vector<8x1xf32> to vector<8x256xf32>
    %133 = vector.broadcast %131 : vector<1x256xf32> to vector<8x256xf32>
    %134 = arith.mulf %132, %133 : vector<8x256xf32>
    %135 = arith.addf %123, %134 : vector<8x256xf32>
    %136 = vector.extract_strided_slice %2 {offsets = [0, 14], sizes = [8, 1], strides = [1, 1]} : vector<8x27xf32> to vector<8x1xf32>
    %137 = vector.extract_strided_slice %129 {offsets = [1, 0], sizes = [1, 256], strides = [1, 1]} : vector<3x256xf32> to vector<1x256xf32>
    %138 = vector.broadcast %136 : vector<8x1xf32> to vector<8x256xf32>
    %139 = vector.broadcast %137 : vector<1x256xf32> to vector<8x256xf32>
    %140 = arith.mulf %138, %139 : vector<8x256xf32>
    %141 = arith.addf %135, %140 : vector<8x256xf32>
    %142 = vector.extract_strided_slice %2 {offsets = [0, 23], sizes = [8, 1], strides = [1, 1]} : vector<8x27xf32> to vector<8x1xf32>
    %143 = vector.extract_strided_slice %129 {offsets = [2, 0], sizes = [1, 256], strides = [1, 1]} : vector<3x256xf32> to vector<1x256xf32>
    %144 = vector.broadcast %142 : vector<8x1xf32> to vector<8x256xf32>
    %145 = vector.broadcast %143 : vector<1x256xf32> to vector<8x256xf32>
    %146 = arith.mulf %144, %145 : vector<8x256xf32>
    %147 = arith.addf %141, %146 : vector<8x256xf32>
    %148 = vector.extract_strided_slice %1 {offsets = [0, 15], sizes = [3, 241], strides = [1, 1]} : vector<3x256xf32> to vector<3x241xf32>
    %149 = vector.extract_strided_slice %1 {offsets = [0, 0], sizes = [3, 15], strides = [1, 1]} : vector<3x256xf32> to vector<3x15xf32>
    %150 = tpu.concatenate %148, %149 in 1 : vector<3x241xf32>, vector<3x15xf32> -> vector<3x256xf32>
    %151 = vector.extract_strided_slice %3 {offsets = [6, 0], sizes = [1, 256], strides = [1, 1]} : vector<9x256xf32> to vector<1x256xf32>
    %152 = vector.broadcast %151 : vector<1x256xf32> to vector<3x256xf32>
    %153 = arith.mulf %150, %152 : vector<3x256xf32>
    %154 = vector.extract_strided_slice %2 {offsets = [0, 6], sizes = [8, 1], strides = [1, 1]} : vector<8x27xf32> to vector<8x1xf32>
    %155 = vector.extract_strided_slice %153 {offsets = [0, 0], sizes = [1, 256], strides = [1, 1]} : vector<3x256xf32> to vector<1x256xf32>
    %156 = vector.broadcast %154 : vector<8x1xf32> to vector<8x256xf32>
    %157 = vector.broadcast %155 : vector<1x256xf32> to vector<8x256xf32>
    %158 = arith.mulf %156, %157 : vector<8x256xf32>
    %159 = arith.addf %147, %158 : vector<8x256xf32>
    %160 = vector.extract_strided_slice %2 {offsets = [0, 15], sizes = [8, 1], strides = [1, 1]} : vector<8x27xf32> to vector<8x1xf32>
    %161 = vector.extract_strided_slice %153 {offsets = [1, 0], sizes = [1, 256], strides = [1, 1]} : vector<3x256xf32> to vector<1x256xf32>
    %162 = vector.broadcast %160 : vector<8x1xf32> to vector<8x256xf32>
    %163 = vector.broadcast %161 : vector<1x256xf32> to vector<8x256xf32>
    %164 = arith.mulf %162, %163 : vector<8x256xf32>
    %165 = arith.addf %159, %164 : vector<8x256xf32>
    %166 = vector.extract_strided_slice %2 {offsets = [0, 24], sizes = [8, 1], strides = [1, 1]} : vector<8x27xf32> to vector<8x1xf32>
    %167 = vector.extract_strided_slice %153 {offsets = [2, 0], sizes = [1, 256], strides = [1, 1]} : vector<3x256xf32> to vector<1x256xf32>
    %168 = vector.broadcast %166 : vector<8x1xf32> to vector<8x256xf32>
    %169 = vector.broadcast %167 : vector<1x256xf32> to vector<8x256xf32>
    %170 = arith.mulf %168, %169 : vector<8x256xf32>
    %171 = arith.addf %165, %170 : vector<8x256xf32>
    %172 = vector.extract_strided_slice %1 {offsets = [0, 16], sizes = [3, 240], strides = [1, 1]} : vector<3x256xf32> to vector<3x240xf32>
    %173 = vector.extract_strided_slice %1 {offsets = [0, 0], sizes = [3, 16], strides = [1, 1]} : vector<3x256xf32> to vector<3x16xf32>
    %174 = tpu.concatenate %172, %173 in 1 : vector<3x240xf32>, vector<3x16xf32> -> vector<3x256xf32>
    %175 = vector.extract_strided_slice %3 {offsets = [7, 0], sizes = [1, 256], strides = [1, 1]} : vector<9x256xf32> to vector<1x256xf32>
    %176 = vector.broadcast %175 : vector<1x256xf32> to vector<3x256xf32>
    %177 = arith.mulf %174, %176 : vector<3x256xf32>
    %178 = vector.extract_strided_slice %2 {offsets = [0, 7], sizes = [8, 1], strides = [1, 1]} : vector<8x27xf32> to vector<8x1xf32>
    %179 = vector.extract_strided_slice %177 {offsets = [0, 0], sizes = [1, 256], strides = [1, 1]} : vector<3x256xf32> to vector<1x256xf32>
    %180 = vector.broadcast %178 : vector<8x1xf32> to vector<8x256xf32>
    %181 = vector.broadcast %179 : vector<1x256xf32> to vector<8x256xf32>
    %182 = arith.mulf %180, %181 : vector<8x256xf32>
    %183 = arith.addf %171, %182 : vector<8x256xf32>
    %184 = vector.extract_strided_slice %2 {offsets = [0, 16], sizes = [8, 1], strides = [1, 1]} : vector<8x27xf32> to vector<8x1xf32>
    %185 = vector.extract_strided_slice %177 {offsets = [1, 0], sizes = [1, 256], strides = [1, 1]} : vector<3x256xf32> to vector<1x256xf32>
    %186 = vector.broadcast %184 : vector<8x1xf32> to vector<8x256xf32>
    %187 = vector.broadcast %185 : vector<1x256xf32> to vector<8x256xf32>
    %188 = arith.mulf %186, %187 : vector<8x256xf32>
    %189 = arith.addf %183, %188 : vector<8x256xf32>
    %190 = vector.extract_strided_slice %2 {offsets = [0, 25], sizes = [8, 1], strides = [1, 1]} : vector<8x27xf32> to vector<8x1xf32>
    %191 = vector.extract_strided_slice %177 {offsets = [2, 0], sizes = [1, 256], strides = [1, 1]} : vector<3x256xf32> to vector<1x256xf32>
    %192 = vector.broadcast %190 : vector<8x1xf32> to vector<8x256xf32>
    %193 = vector.broadcast %191 : vector<1x256xf32> to vector<8x256xf32>
    %194 = arith.mulf %192, %193 : vector<8x256xf32>
    %195 = arith.addf %189, %194 : vector<8x256xf32>
    %196 = vector.extract_strided_slice %1 {offsets = [0, 17], sizes = [3, 239], strides = [1, 1]} : vector<3x256xf32> to vector<3x239xf32>
    %197 = vector.extract_strided_slice %1 {offsets = [0, 0], sizes = [3, 17], strides = [1, 1]} : vector<3x256xf32> to vector<3x17xf32>
    %198 = tpu.concatenate %196, %197 in 1 : vector<3x239xf32>, vector<3x17xf32> -> vector<3x256xf32>
    %199 = vector.extract_strided_slice %3 {offsets = [8, 0], sizes = [1, 256], strides = [1, 1]} : vector<9x256xf32> to vector<1x256xf32>
    %200 = vector.broadcast %199 : vector<1x256xf32> to vector<3x256xf32>
    %201 = arith.mulf %198, %200 : vector<3x256xf32>
    %202 = vector.extract_strided_slice %2 {offsets = [0, 8], sizes = [8, 1], strides = [1, 1]} : vector<8x27xf32> to vector<8x1xf32>
    %203 = vector.extract_strided_slice %201 {offsets = [0, 0], sizes = [1, 256], strides = [1, 1]} : vector<3x256xf32> to vector<1x256xf32>
    %204 = vector.broadcast %202 : vector<8x1xf32> to vector<8x256xf32>
    %205 = vector.broadcast %203 : vector<1x256xf32> to vector<8x256xf32>
    %206 = arith.mulf %204, %205 : vector<8x256xf32>
    %207 = arith.addf %195, %206 : vector<8x256xf32>
    %208 = vector.extract_strided_slice %2 {offsets = [0, 17], sizes = [8, 1], strides = [1, 1]} : vector<8x27xf32> to vector<8x1xf32>
    %209 = vector.extract_strided_slice %201 {offsets = [1, 0], sizes = [1, 256], strides = [1, 1]} : vector<3x256xf32> to vector<1x256xf32>
    %210 = vector.broadcast %208 : vector<8x1xf32> to vector<8x256xf32>
    %211 = vector.broadcast %209 : vector<1x256xf32> to vector<8x256xf32>
    %212 = arith.mulf %210, %211 : vector<8x256xf32>
    %213 = arith.addf %207, %212 : vector<8x256xf32>
    %214 = vector.extract_strided_slice %2 {offsets = [0, 26], sizes = [8, 1], strides = [1, 1]} : vector<8x27xf32> to vector<8x1xf32>
    %215 = vector.extract_strided_slice %201 {offsets = [2, 0], sizes = [1, 256], strides = [1, 1]} : vector<3x256xf32> to vector<1x256xf32>
    %216 = vector.broadcast %214 : vector<8x1xf32> to vector<8x256xf32>
    %217 = vector.broadcast %215 : vector<1x256xf32> to vector<8x256xf32>
    %218 = arith.mulf %216, %217 : vector<8x256xf32>
    %219 = arith.addf %213, %218 : vector<8x256xf32>
    %cst = arith.constant 5.000000e-01 : f32
    %220 = vector.broadcast %cst : f32 to vector<8x256xf32>
    %221 = arith.mulf %220, %219 : vector<8x256xf32>
    %cst_8 = arith.constant 0.707106769 : f32
    %222 = vector.broadcast %cst_8 : f32 to vector<8x256xf32>
    %223 = arith.mulf %219, %222 : vector<8x256xf32>
    %224 = math.erf %223 : vector<8x256xf32>
    %cst_9 = arith.constant 1.000000e+00 : f32
    %225 = vector.broadcast %cst_9 : f32 to vector<8x256xf32>
    %226 = arith.addf %224, %225 : vector<8x256xf32>
    %227 = arith.mulf %221, %226 : vector<8x256xf32>
    %228 = tpu.concatenate %227, %219 in 0 : vector<8x256xf32>, vector<8x256xf32> -> vector<16x256xf32>
    %c0_10 = arith.constant 0 : index
    %c0_11 = arith.constant 0 : index
    %c0_12 = arith.constant 0 : index
    %c0_13 = arith.constant 0 : index
    %229 = vector.load %arg5[%c0_10, %c0_11, %c0_12, %c0_13] : memref<4x1x16x256xf32, #tpu.memory_space<vmem>>, vector<1x1x16x256xf32>
    %230 = vector.shape_cast %229 : vector<1x1x16x256xf32> to vector<16x256xf32>
    %231 = vector.shape_cast %228 : vector<16x256xf32> to vector<1x1x16x256xf32>
    tpu.vector_store %arg5[%c0_10, %c0_11, %c0_12, %c0_13], %231 {strides = array<i32>} : memref<4x1x16x256xf32, #tpu.memory_space<vmem>>, vector<1x1x16x256xf32>,
    %c1 = arith.constant 1 : index
    %c0_14 = arith.constant 0 : index
    %c0_15 = arith.constant 0 : index
    %c0_16 = arith.constant 0 : index
    %232 = vector.load %arg5[%c1, %c0_14, %c0_15, %c0_16] : memref<4x1x16x256xf32, #tpu.memory_space<vmem>>, vector<1x1x16x256xf32>
    %233 = vector.shape_cast %232 : vector<1x1x16x256xf32> to vector<16x256xf32>
    %234 = vector.shape_cast %228 : vector<16x256xf32> to vector<1x1x16x256xf32>
    tpu.vector_store %arg5[%c1, %c0_14, %c0_15, %c0_16], %234 {strides = array<i32>} : memref<4x1x16x256xf32, #tpu.memory_space<vmem>>, vector<1x1x16x256xf32>,
    %c2 = arith.constant 2 : index
    %c0_17 = arith.constant 0 : index
    %c0_18 = arith.constant 0 : index
    %c0_19 = arith.constant 0 : index
    %235 = vector.load %arg5[%c2, %c0_17, %c0_18, %c0_19] : memref<4x1x16x256xf32, #tpu.memory_space<vmem>>, vector<1x1x16x256xf32>
    %236 = vector.shape_cast %235 : vector<1x1x16x256xf32> to vector<16x256xf32>
    %237 = vector.shape_cast %228 : vector<16x256xf32> to vector<1x1x16x256xf32>
    tpu.vector_store %arg5[%c2, %c0_17, %c0_18, %c0_19], %237 {strides = array<i32>} : memref<4x1x16x256xf32, #tpu.memory_space<vmem>>, vector<1x1x16x256xf32>,
    %c3 = arith.constant 3 : index
    %c0_20 = arith.constant 0 : index
    %c0_21 = arith.constant 0 : index
    %c0_22 = arith.constant 0 : index
    %238 = vector.load %arg5[%c3, %c0_20, %c0_21, %c0_22] : memref<4x1x16x256xf32, #tpu.memory_space<vmem>>, vector<1x1x16x256xf32>
    %239 = vector.shape_cast %238 : vector<1x1x16x256xf32> to vector<16x256xf32>
    %240 = vector.shape_cast %228 : vector<16x256xf32> to vector<1x1x16x256xf32>
    tpu.vector_store %arg5[%c3, %c0_20, %c0_21, %c0_22], %240 {strides = array<i32>} : memref<4x1x16x256xf32, #tpu.memory_space<vmem>>, vector<1x1x16x256xf32>,
    return
  }
  func.func @transform_0(%arg0: i32) -> (i32, i32, i32) {
    %c0_i32 = arith.constant 0 : i32
    %c0_i32_0 = arith.constant 0 : i32
    %c0_i32_1 = arith.constant 0 : i32
    return %arg0, %c0_i32, %c0_i32_0 : i32, i32, i32
  }
  func.func @transform_1(%arg0: i32) -> (i32, i32) {
    %c0_i32 = arith.constant 0 : i32
    %c0_i32_0 = arith.constant 0 : i32
    %c0_i32_1 = arith.constant 0 : i32
    return %c0_i32, %c0_i32_0 : i32, i32
  }
  func.func @transform_2(%arg0: i32) -> (i32, i32) {
    %c0_i32 = arith.constant 0 : i32
    %c0_i32_0 = arith.constant 0 : i32
    %c0_i32_1 = arith.constant 0 : i32
    return %c0_i32, %c0_i32_0 : i32, i32
  }
  func.func @transform_3(%arg0: i32) -> (i32, i32) {
    %c0_i32 = arith.constant 0 : i32
    %c0_i32_0 = arith.constant 0 : i32
    %c0_i32_1 = arith.constant 0 : i32
    return %c0_i32, %c0_i32_0 : i32, i32
  }
  func.func @transform_4(%arg0: i32) -> (i32, i32, i32, i32) {
    %c0_i32 = arith.constant 0 : i32
    %c0_i32_0 = arith.constant 0 : i32
    %c0_i32_1 = arith.constant 0 : i32
    %c0_i32_2 = arith.constant 0 : i32
    return %c0_i32, %arg0, %c0_i32_0, %c0_i32_1 : i32, i32, i32, i32
  }
}

</mosaic_0001>

<llo_original>
// kernel: model_forward.1
$region0: #{model_forward.1}
  #allocation0 [shape = 'u32[]', space=smem, size = 0x4, offset = 0x4, fixed_abs, tag = 'smem constant byte address 0x4 - core index']
  #allocation1 [shape = 'u32[72,128]{1,0:T(1,128)}', space=vmem, size = 0x9000, scoped, tag = 'internal scratch']
  %s0 = inlined_call_operand.vmem [shape: f32[2,3,256], index: 0, kind: input, shape index: {}]
  %s1 = inlined_call_operand.vmem [shape: f32[8,27], index: 1, kind: input, shape index: {}]
  %s2 = inlined_call_operand.vmem [shape: f32[8,1], index: 2, kind: input, shape index: {}]
  %s3 = inlined_call_operand.vmem [shape: f32[9,256], index: 3, kind: input, shape index: {}]
  %s4 = inlined_call_operand.vmem [shape: f32[4,2,16,256], index: 4, kind: output, shape index: {}]
  %s5 = sld [smem:[#allocation0]]
  $region68: #{model_forward.1} parent=0
    _
  %s7 = ssub.s32 1, %s5
  %s8 = scalar_select 0, %s7, %s5
  $region1: #{model_forward.1} parent=0
    #allocation2 [shape = 'u8[131072]{0}', space=vmem, size = 0x20000, scoped, tag = 'output window, operand 0']
    loop: start=0, step=1, limit=4
    $region2: #{model_forward.1} parent=1 // loop_pre_header
      _
    $region3: #{model_forward.1} parent=1 // loop_header
      %s10 = sphi 0, %s14
      %p11 = scmp.ge.s32.totalorder %s10, 4
      %s20 = sphi 0, %s22
      %s23 = sphi 0, %s20
      %s24 = sphi 0, %s23
      %s40 = sphi 0, %s24
      %s44 = sphi 0, %s44
      %s46 = sphi 0, %s44
      %s47 = sphi 0, %s46
      %s61 = sphi 0, %s47
      %s65 = sphi 0, %s65
      %s67 = sphi 0, %s65
      %s68 = sphi 0, %s67
      %s82 = sphi 0, %s68
      %s86 = sphi 0, %s86
      %s88 = sphi 0, %s86
      %s89 = sphi 0, %s88
      %s103 = sphi 0, %s89
      %s109 = sphi 0, %s111
      %s112 = sphi 0, %s109
      %s113 = sphi 0, %s112
      %s129 = sphi 0, %s113
    $region4: #{model_forward.1} parent=1 // loop_header_branch
      %13 = sbr.rel (%p11) target = $region8
    $region5: #{model_forward.1} parent=1 // loop_body
      %s15 = ssub.s32 %s10, 1
      %s16 = ssub.s32 %s10, 2
      %s17 = sadd.s32 %s10, 1
      %s18 = ssub.s32 %s10, %s17
      %p19 = scmp.eq.s32.totalorder %s18, 0
      %s21 = sadd.s32 %s20, 1
      %s22 = scalar_select %p19, %s20, %s21
      %p25 = pneg %p19
      %p26 = scmp.eq.s32.totalorder %s10, 1
      %p27 = por %p25, %p26
      %p28 = scmp.ne.s32.totalorder %s20, %s23
      %p29 = scmp.eq.s32.totalorder %s10, 0
      %p30 = por %p28, %p29
      %p31 = scmp.ne.s32.totalorder %s20, %s23
      %p32 = scmp.eq.s32.totalorder %s15, 1
      %p33 = por %p31, %p32
      %p34 = scmp.ne.s32.totalorder %s23, %s24
      %p35 = scmp.eq.s32.totalorder %s15, 0
      %p36 = por %p34, %p35
      %p37 = scmp.ne.s32.totalorder %s23, %s24
      %p38 = scmp.eq.s32.totalorder %s16, 1
      %p39 = por %p37, %p38
      %p41 = scmp.ne.s32.totalorder %s24, %s40
      %p42 = scmp.eq.s32.totalorder %s16, 0
      %p43 = por %p41, %p42
      %s45 = sadd.s32 %s44, 1
      %p48 = scmp.eq.s32.totalorder %s10, 1
      %p49 = scmp.ne.s32.totalorder %s44, %s46
      %p50 = scmp.eq.s32.totalorder %s10, 0
      %p51 = por %p49, %p50
      %p52 = scmp.ne.s32.totalorder %s44, %s46
      %p53 = scmp.eq.s32.totalorder %s15, 1
      %p54 = por %p52, %p53
      %p55 = scmp.ne.s32.totalorder %s46, %s47
      %p56 = scmp.eq.s32.totalorder %s15, 0
      %p57 = por %p55, %p56
      %p58 = scmp.ne.s32.totalorder %s46, %s47
      %p59 = scmp.eq.s32.totalorder %s16, 1
      %p60 = por %p58, %p59
      %p62 = scmp.ne.s32.totalorder %s47, %s61
      %p63 = scmp.eq.s32.totalorder %s16, 0
      %p64 = por %p62, %p63
      %s66 = sadd.s32 %s65, 1
      %p69 = scmp.eq.s32.totalorder %s10, 1
      %p70 = scmp.ne.s32.totalorder %s65, %s67
      %p71 = scmp.eq.s32.totalorder %s10, 0
      %p72 = por %p70, %p71
      %p73 = scmp.ne.s32.totalorder %s65, %s67
      %p74 = scmp.eq.s32.totalorder %s15, 1
      %p75 = por %p73, %p74
      %p76 = scmp.ne.s32.totalorder %s67, %s68
      %p77 = scmp.eq.s32.totalorder %s15, 0
      %p78 = por %p76, %p77
      %p79 = scmp.ne.s32.totalorder %s67, %s68
      %p80 = scmp.eq.s32.totalorder %s16, 1
      %p81 = por %p79, %p80
      %p83 = scmp.ne.s32.totalorder %s68, %s82
      %p84 = scmp.eq.s32.totalorder %s16, 0
      %p85 = por %p83, %p84
      %s87 = sadd.s32 %s86, 1
      %p90 = scmp.eq.s32.totalorder %s10, 1
      %p91 = scmp.ne.s32.totalorder %s86, %s88
      %p92 = scmp.eq.s32.totalorder %s10, 0
      %p93 = por %p91, %p92
      %p94 = scmp.ne.s32.totalorder %s86, %s88
      %p95 = scmp.eq.s32.totalorder %s15, 1
      %p96 = por %p94, %p95
      %p97 = scmp.ne.s32.totalorder %s88, %s89
      %p98 = scmp.eq.s32.totalorder %s15, 0
      %p99 = por %p97, %p98
      %p100 = scmp.ne.s32.totalorder %s88, %s89
      %p101 = scmp.eq.s32.totalorder %s16, 1
      %p102 = por %p100, %p101
      %p104 = scmp.ne.s32.totalorder %s89, %s103
      %p105 = scmp.eq.s32.totalorder %s16, 0
      %p106 = por %p104, %p105
      %s107 = ssub.s32 %s10, %s17
      %p108 = scmp.eq.s32.totalorder %s107, 0
      %s110 = sadd.s32 %s109, 1
      %s111 = scalar_select %p108, %s109, %s110
      %p114 = pneg %p108
      %p115 = scmp.eq.s32.totalorder %s10, 1
      %p116 = por %p114, %p115
      %p117 = scmp.ne.s32.totalorder %s109, %s112
      %p118 = scmp.eq.s32.totalorder %s10, 0
      %p119 = por %p117, %p118
      %p120 = scmp.ne.s32.totalorder %s109, %s112
      %p121 = scmp.eq.s32.totalorder %s15, 1
      %p122 = por %p120, %p121
      %p123 = scmp.ne.s32.totalorder %s112, %s113
      %p124 = scmp.eq.s32.totalorder %s15, 0
      %p125 = por %p123, %p124
      %p126 = scmp.ne.s32.totalorder %s112, %s113
      %p127 = scmp.eq.s32.totalorder %s16, 1
      %p128 = por %p126, %p127
      %p130 = scmp.ne.s32.totalorder %s113, %s129
      %p131 = scmp.eq.s32.totalorder %s16, 0
      %p132 = por %p130, %p131
      %p133 = scmp.le.s32.totalorder 1, %s10
      %p134 = scmp.lt.s32.totalorder %s10, 3
      %p135 = pnand %p133, %p134
      %p136 = pneg %p135
      // Predicated region
      $region9: #{model_forward.1} parent=5 // pred_check
        _
      $region10: #{model_forward.1} parent=5 // pred_check_branch
        %138 = sbr.rel (%p135) target = $region12
      $region11: #{model_forward.1} parent=5 // pred_region
        %s139 = ssub.s32 %s10, 1
        // Predicated region
        $region13: #{model_forward.1} parent=11 // pred_check
          %p140 = pneg %p57
        $region14: #{model_forward.1} parent=11 // pred_check_branch
          %142 = sbr.rel (%p140) target = $region16
        $region15: #{model_forward.1} parent=11 // pred_region
          _
        $region16: #{model_forward.1} parent=11 // pred_fallthru
          _
        // Predicated region
        $region17: #{model_forward.1} parent=11 // pred_check
          %p143 = pneg %p78
        $region18: #{model_forward.1} parent=11 // pred_check_branch
          %145 = sbr.rel (%p143) target = $region20
        $region19: #{model_forward.1} parent=11 // pred_region
          _
        $region20: #{model_forward.1} parent=11 // pred_fallthru
          _
        // Predicated region
        $region21: #{model_forward.1} parent=11 // pred_check
          %p146 = pneg %p99
        $region22: #{model_forward.1} parent=11 // pred_check_branch
          %148 = sbr.rel (%p146) target = $region24
        $region23: #{model_forward.1} parent=11 // pred_region
          _
        $region24: #{model_forward.1} parent=11 // pred_fallthru
          _
      $region12: #{model_forward.1} parent=5 // pred_fallthru
        _
      %p149 = scmp.lt.s32.totalorder %s10, 2
      // Predicated region
      $region25: #{model_forward.1} parent=5 // pred_check
        %p150 = pneg %p149
      $region26: #{model_forward.1} parent=5 // pred_check_branch
        %152 = sbr.rel (%p150) target = $region28
      $region27: #{model_forward.1} parent=5 // pred_region
        // Predicated region
        $region29: #{model_forward.1} parent=27 // pred_check
          %p153 = pneg %p30
        $region30: #{model_forward.1} parent=27 // pred_check_branch
          %155 = sbr.rel (%p153) target = $region32
        $region31: #{model_forward.1} parent=27 // pred_region
          %p156 = scmp.lt.s32.totalorder %s10, 1
          %s157 = scalar_select %p156, %s10, 1
          %s158 = smul.addr %s157, 2
          %s159 = smul.addr %s158, 4
          %s160 = scalar_lea.vmem %s0, %s159
        $region32: #{model_forward.1} parent=27 // pred_fallthru
          _
      $region28: #{model_forward.1} parent=5 // pred_fallthru
        _
      %p161 = scmp.le.s32.totalorder 1, %s10
      %p162 = scmp.lt.s32.totalorder %s10, 3
      %p163 = pnand %p161, %p162
      %p164 = pneg %p163
      // Predicated region
      $region33: #{model_forward.1} parent=5 // pred_check
        _
      $region34: #{model_forward.1} parent=5 // pred_check_branch
        %166 = sbr.rel (%p163) target = $region36
      $region35: #{model_forward.1} parent=5 // pred_region
        %s167 = ssub.s32 %s10, 1
        %p168 = scmp.lt.s32.totalorder %s15, 1
        %s169 = scalar_select %p168, %s15, 1
        %s170 = smul.addr %s169, 2
        %s171 = smul.addr %s170, 4
        %s172 = scalar_lea.vmem %s0, %s171
        %p173 = pneg %p36
        %p174 = pneg %p33
        %p175 = pneg %p57
        %p176 = pneg %p54
        %p177 = pneg %p78
        %p178 = pneg %p75
        %p179 = pneg %p99
        %p180 = pneg %p96
        %p181 = pneg %p125
        %p182 = pneg %p122
        %s183 = sand.u32 %s112, 1
        %s184 = sand.u32 %s112, 1
        %s185 = smul.addr %s184, 128
        %s186 = scalar_lea.vmem [#allocation2], %s185
        %p187 = scmp.lt.s32.totalorder %s15, 1
        %s188 = scalar_select %p187, %s15, 1
        %s189 = smul.addr %s188, 2
        %s190 = smul.addr %s189, 4
        %s191 = scalar_lea.vmem %s0, %s190
        %v192 = vld [vmem:[%s191] sm:$0x77]
        %v193 = vld [vmem:[%s1] sm:$0xff]
        %v194 = vld [vmem:[%s3] sm:$0xff]
        %v195 = vld [vmem:[%s3 + $0x8] sm:$0xff]
        %v196 = vld [vmem:[%s3 + $0x10] sm:$0x1]
        %v197 = vld [vmem:[%s3 + $0x18] sm:$0x1]
        %v198 = vld [vmem:[%s2] sm:$0xff]
        %200 = vset.pattern.permute.xlu0 0
        %201 = vperm.xlu0 %200, %v198
        %v202 = vpop.permute.xlu0 %201
        %205 = vst [vmem:[#allocation1] ss:$2 sm:$0xff] %v192
        %v206 = vld.sshfl [vmem:[#allocation1 + $0x8] sm:$0xff pattern:$0x75316420]
        %207 = vrot.lane.b32.xlu0 %v206, 17
        %v208 = vpop.permute.xlu0 %207
        %210 = vst [vmem:[#allocation1] ss:$2 sm:$0xff] %v192
        %v211 = vld.sshfl [vmem:[#allocation1] sm:$0xff pattern:$0x75316420]
        %v212 = vld.sshfl [vmem:[#allocation1 + $0x8] sm:$0xff pattern:$0x75316420]
        %213 = vrot.lane.b32.xlu0 %v211, 17
        %v214 = vpop.permute.xlu0 %213
        %215 = vrot.lane.b32.xlu0 %v212, 17
        %v216 = vpop.permute.xlu0 %215
        %vm217 = vcmask 138240
        %v218 = vsel %vm217, %v214, %v216
        %v221 = vsel %vm217, %v208, %v214
        %v222 = vperm.slane %v194, 0
        %v223 = vperm.slane %v195, 0
        %v224 = vmul.f32 %v221, %v222
        %v225 = vmul.f32 %v218, %v223
        %227 = vset.pattern.permute.xlu0 0
        %228 = vperm.xlu0 %227, %v193
        %v229 = vpop.permute.xlu0 %228
        %v231 = vperm.slane %v224, 0
        %v232 = vperm.slane %v225, 0
        %v233 = vmul.f32 %v229, %v231
        %v234 = vmul.f32 %v229, %v232
        %v235 = vadd.f32 %v202, %v233
        %v236 = vadd.f32 %v202, %v234
        %237 = vset.pattern.permute.xlu0 9
        %238 = vperm.xlu0 %237, %v193
        %v239 = vpop.permute.xlu0 %238
        %v241 = vperm.slane %v224, 1
        %v242 = vperm.slane %v225, 1
        %v243 = vmul.f32 %v239, %v241
        %v244 = vmul.f32 %v239, %v242
        %v245 = vadd.f32 %v235, %v243
        %v246 = vadd.f32 %v236, %v244
        %247 = vset.pattern.permute.xlu0 18
        %248 = vperm.xlu0 %247, %v193
        %v249 = vpop.permute.xlu0 %248
        %v251 = vperm.slane %v224, 2
        %v252 = vperm.slane %v225, 2
        %v253 = vmul.f32 %v249, %v251
        %v254 = vmul.f32 %v249, %v252
        %v255 = vadd.f32 %v245, %v253
        %v256 = vadd.f32 %v246, %v254
        %257 = vst [vmem:[#allocation1] ss:$2 sm:$0xff] %v192
        %v258 = vld.sshfl [vmem:[#allocation1 + $0x8] sm:$0xff pattern:$0x75316420]
        %259 = vrot.lane.b32.xlu0 %v258, 16
        %v260 = vpop.permute.xlu0 %259
        %262 = vst [vmem:[#allocation1] ss:$2 sm:$0xff] %v192
        %v263 = vld.sshfl [vmem:[#allocation1] sm:$0xff pattern:$0x75316420]
        %v264 = vld.sshfl [vmem:[#allocation1 + $0x8] sm:$0xff pattern:$0x75316420]
        %265 = vrot.lane.b32.xlu0 %v263, 16
        %v266 = vpop.permute.xlu0 %265
        %267 = vrot.lane.b32.xlu0 %v264, 16
        %v268 = vpop.permute.xlu0 %267
        %vm269 = vcmask 130048
        %v270 = vsel %vm269, %v266, %v268
        %v273 = vsel %vm269, %v260, %v266
        %v274 = vperm.slane %v194, 1
        %v275 = vperm.slane %v195, 1
        %v276 = vmul.f32 %v273, %v274
        %v277 = vmul.f32 %v270, %v275
        %278 = vset.pattern.permute.xlu0 1
        %279 = vperm.xlu0 %278, %v193
        %v280 = vpop.permute.xlu0 %279
        %v282 = vperm.slane %v276, 0
        %v283 = vperm.slane %v277, 0
        %v284 = vmul.f32 %v280, %v282
        %v285 = vmul.f32 %v280, %v283
        %v286 = vadd.f32 %v255, %v284
        %v287 = vadd.f32 %v256, %v285
        %288 = vset.pattern.permute.xlu0 10
        %289 = vperm.xlu0 %288, %v193
        %v290 = vpop.permute.xlu0 %289
        %v292 = vperm.slane %v276, 1
        %v293 = vperm.slane %v277, 1
        %v294 = vmul.f32 %v290, %v292
        %v295 = vmul.f32 %v290, %v293
        %v296 = vadd.f32 %v286, %v294
        %v297 = vadd.f32 %v287, %v295
        %298 = vset.pattern.permute.xlu0 19
        %299 = vperm.xlu0 %298, %v193
        %v300 = vpop.permute.xlu0 %299
        %v302 = vperm.slane %v276, 2
        %v303 = vperm.slane %v277, 2
        %v304 = vmul.f32 %v300, %v302
        %v305 = vmul.f32 %v300, %v303
        %v306 = vadd.f32 %v296, %v304
        %v307 = vadd.f32 %v297, %v305
        %308 = vst [vmem:[#allocation1] ss:$2 sm:$0xff] %v192
        %v309 = vld.sshfl [vmem:[#allocation1 + $0x8] sm:$0xff pattern:$0x75316420]
        %310 = vrot.lane.b32.xlu0 %v309, 15
        %v311 = vpop.permute.xlu0 %310
        %313 = vst [vmem:[#allocation1] ss:$2 sm:$0xff] %v192
        %v314 = vld.sshfl [vmem:[#allocation1] sm:$0xff pattern:$0x75316420]
        %v315 = vld.sshfl [vmem:[#allocation1 + $0x8] sm:$0xff pattern:$0x75316420]
        %316 = vrot.lane.b32.xlu0 %v314, 15
        %v317 = vpop.permute.xlu0 %316
        %318 = vrot.lane.b32.xlu0 %v315, 15
        %v319 = vpop.permute.xlu0 %318
        %vm320 = vcmask 121856
        %v321 = vsel %vm320, %v317, %v319
        %v324 = vsel %vm320, %v311, %v317
        %v325 = vperm.slane %v194, 2
        %v326 = vperm.slane %v195, 2
        %v327 = vmul.f32 %v324, %v325
        %v328 = vmul.f32 %v321, %v326
        %329 = vset.pattern.permute.xlu0 2
        %330 = vperm.xlu0 %329, %v193
        %v331 = vpop.permute.xlu0 %330
        %v333 = vperm.slane %v327, 0
        %v334 = vperm.slane %v328, 0
        %v335 = vmul.f32 %v331, %v333
        %v336 = vmul.f32 %v331, %v334
        %v337 = vadd.f32 %v306, %v335
        %v338 = vadd.f32 %v307, %v336
        %339 = vset.pattern.permute.xlu0 11
        %340 = vperm.xlu0 %339, %v193
        %v341 = vpop.permute.xlu0 %340
        %v343 = vperm.slane %v327, 1
        %v344 = vperm.slane %v328, 1
        %v345 = vmul.f32 %v341, %v343
        %v346 = vmul.f32 %v341, %v344
        %v347 = vadd.f32 %v337, %v345
        %v348 = vadd.f32 %v338, %v346
        %349 = vset.pattern.permute.xlu0 20
        %350 = vperm.xlu0 %349, %v193
        %v351 = vpop.permute.xlu0 %350
        %v353 = vperm.slane %v327, 2
        %v354 = vperm.slane %v328, 2
        %v355 = vmul.f32 %v351, %v353
        %v356 = vmul.f32 %v351, %v354
        %v357 = vadd.f32 %v347, %v355
        %v358 = vadd.f32 %v348, %v356
        %359 = vst [vmem:[#allocation1] ss:$2 sm:$0xff] %v192
        %v360 = vld.sshfl [vmem:[#allocation1 + $0x8] sm:$0xff pattern:$0x75316420]
        %361 = vrot.lane.b32.xlu0 %v360, 1
        %v362 = vpop.permute.xlu0 %361
        %364 = vst [vmem:[#allocation1] ss:$2 sm:$0xff] %v192
        %v365 = vld.sshfl [vmem:[#allocation1] sm:$0xff pattern:$0x75316420]
        %v366 = vld.sshfl [vmem:[#allocation1 + $0x8] sm:$0xff pattern:$0x75316420]
        %367 = vrot.lane.b32.xlu0 %v365, 1
        %v368 = vpop.permute.xlu0 %367
        %369 = vrot.lane.b32.xlu0 %v366, 1
        %v370 = vpop.permute.xlu0 %369
        %vm371 = vcmask 7168
        %v372 = vsel %vm371, %v368, %v370
        %v375 = vsel %vm371, %v362, %v368
        %v376 = vperm.slane %v194, 3
        %v377 = vperm.slane %v195, 3
        %v378 = vmul.f32 %v375, %v376
        %v379 = vmul.f32 %v372, %v377
        %380 = vset.pattern.permute.xlu0 3
        %381 = vperm.xlu0 %380, %v193
        %v382 = vpop.permute.xlu0 %381
        %v384 = vperm.slane %v378, 0
        %v385 = vperm.slane %v379, 0
        %v386 = vmul.f32 %v382, %v384
        %v387 = vmul.f32 %v382, %v385
        %v388 = vadd.f32 %v357, %v386
        %v389 = vadd.f32 %v358, %v387
        %390 = vset.pattern.permute.xlu0 12
        %391 = vperm.xlu0 %390, %v193
        %v392 = vpop.permute.xlu0 %391
        %v394 = vperm.slane %v378, 1
        %v395 = vperm.slane %v379, 1
        %v396 = vmul.f32 %v392, %v394
        %v397 = vmul.f32 %v392, %v395
        %v398 = vadd.f32 %v388, %v396
        %v399 = vadd.f32 %v389, %v397
        %400 = vset.pattern.permute.xlu0 21
        %401 = vperm.xlu0 %400, %v193
        %v402 = vpop.permute.xlu0 %401
        %v404 = vperm.slane %v378, 2
        %v405 = vperm.slane %v379, 2
        %v406 = vmul.f32 %v402, %v404
        %v407 = vmul.f32 %v402, %v405
        %v408 = vadd.f32 %v398, %v406
        %v409 = vadd.f32 %v399, %v407
        %v410 = vperm.slane %v194, 4
        %v411 = vperm.slane %v195, 4
        %v414 = vrot.slane %v411, 4
        %vm415 = vcmask 1043456
        %v416 = vsel %vm415, %v410, %v414
        %v418 = vmul.f32 %v192, %v416
        %419 = vset.pattern.permute.xlu0 4
        %420 = vperm.xlu0 %419, %v193
        %v421 = vpop.permute.xlu0 %420
        %v424 = vperm.slane %v418, 0
        %v425 = vperm.slane %v418, 4
        %v428 = vperm.slane %v424, 0
        %v429 = vperm.slane %v425, 0
        %v430 = vmul.f32 %v421, %v428
        %v431 = vmul.f32 %v421, %v429
        %v432 = vadd.f32 %v408, %v430
        %v433 = vadd.f32 %v409, %v431
        %434 = vset.pattern.permute.xlu0 13
        %435 = vperm.xlu0 %434, %v193
        %v436 = vpop.permute.xlu0 %435
        %v438 = vperm.slane %v418, 1
        %v439 = vperm.slane %v418, 5
        %v442 = vperm.slane %v438, 1
        %v443 = vperm.slane %v439, 1
        %v444 = vmul.f32 %v436, %v442
        %v445 = vmul.f32 %v436, %v443
        %v446 = vadd.f32 %v432, %v444
        %v447 = vadd.f32 %v433, %v445
        %448 = vset.pattern.permute.xlu0 22
        %449 = vperm.xlu0 %448, %v193
        %v450 = vpop.permute.xlu0 %449
        %v452 = vperm.slane %v418, 2
        %v453 = vperm.slane %v418, 6
        %v456 = vperm.slane %v452, 2
        %v457 = vperm.slane %v453, 2
        %v458 = vmul.f32 %v450, %v456
        %v459 = vmul.f32 %v450, %v457
        %v460 = vadd.f32 %v446, %v458
        %v461 = vadd.f32 %v447, %v459
        %462 = vst [vmem:[#allocation1] ss:$2 sm:$0xff] %v192
        %v463 = vld.sshfl [vmem:[#allocation1] sm:$0xff pattern:$0x75316420]
        %v464 = vld.sshfl [vmem:[#allocation1 + $0x8] sm:$0xff pattern:$0x75316420]
        %465 = vrot.lane.b32.xlu0 %v463, 127
        %v466 = vpop.permute.xlu0 %465
        %467 = vrot.lane.b32.xlu0 %v464, 127
        %v468 = vpop.permute.xlu0 %467
        %vm469 = vcmask 1039360
        %v470 = vsel %vm469, %v466, %v468
        %473 = vst [vmem:[#allocation1] ss:$2 sm:$0xff] %v192
        %v474 = vld.sshfl [vmem:[#allocation1] sm:$0xff pattern:$0x75316420]
        %475 = vrot.lane.b32.xlu0 %v474, 127
        %v476 = vpop.permute.xlu0 %475
        %v478 = vsel %vm469, %v468, %v476
        %v479 = vperm.slane %v194, 5
        %v480 = vperm.slane %v195, 5
        %v481 = vmul.f32 %v470, %v479
        %v482 = vmul.f32 %v478, %v480
        %483 = vset.pattern.permute.xlu0 5
        %484 = vperm.xlu0 %483, %v193
        %v485 = vpop.permute.xlu0 %484
        %v487 = vperm.slane %v481, 0
        %v488 = vperm.slane %v482, 0
        %v489 = vmul.f32 %v485, %v487
        %v490 = vmul.f32 %v485, %v488
        %v491 = vadd.f32 %v460, %v489
        %v492 = vadd.f32 %v461, %v490
        %493 = vset.pattern.permute.xlu0 14
        %494 = vperm.xlu0 %493, %v193
        %v495 = vpop.permute.xlu0 %494
        %v497 = vperm.slane %v481, 1
        %v498 = vperm.slane %v482, 1
        %v499 = vmul.f32 %v495, %v497
        %v500 = vmul.f32 %v495, %v498
        %v501 = vadd.f32 %v491, %v499
        %v502 = vadd.f32 %v492, %v500
        %503 = vset.pattern.permute.xlu0 23
        %504 = vperm.xlu0 %503, %v193
        %v505 = vpop.permute.xlu0 %504
        %v507 = vperm.slane %v481, 2
        %v508 = vperm.slane %v482, 2
        %v509 = vmul.f32 %v505, %v507
        %v510 = vmul.f32 %v505, %v508
        %v511 = vadd.f32 %v501, %v509
        %v512 = vadd.f32 %v502, %v510
        %513 = vst [vmem:[#allocation1] ss:$2 sm:$0xff] %v192
        %v514 = vld.sshfl [vmem:[#allocation1] sm:$0xff pattern:$0x75316420]
        %v515 = vld.sshfl [vmem:[#allocation1 + $0x8] sm:$0xff pattern:$0x75316420]
        %516 = vrot.lane.b32.xlu0 %v514, 113
        %v517 = vpop.permute.xlu0 %516
        %518 = vrot.lane.b32.xlu0 %v515, 113
        %v519 = vpop.permute.xlu0 %518
        %vm520 = vcmask 924672
        %v521 = vsel %vm520, %v517, %v519
        %524 = vst [vmem:[#allocation1] ss:$2 sm:$0xff] %v192
        %v525 = vld.sshfl [vmem:[#allocation1] sm:$0xff pattern:$0x75316420]
        %526 = vrot.lane.b32.xlu0 %v525, 113
        %v527 = vpop.permute.xlu0 %526
        %v529 = vsel %vm520, %v519, %v527
        %v530 = vperm.slane %v194, 6
        %v531 = vperm.slane %v195, 6
        %v532 = vmul.f32 %v521, %v530
        %v533 = vmul.f32 %v529, %v531
        %534 = vset.pattern.permute.xlu0 6
        %535 = vperm.xlu0 %534, %v193
        %v536 = vpop.permute.xlu0 %535
        %v538 = vperm.slane %v532, 0
        %v539 = vperm.slane %v533, 0
        %v540 = vmul.f32 %v536, %v538
        %v541 = vmul.f32 %v536, %v539
        %v542 = vadd.f32 %v511, %v540
        %v543 = vadd.f32 %v512, %v541
        %544 = vset.pattern.permute.xlu0 15
        %545 = vperm.xlu0 %544, %v193
        %v546 = vpop.permute.xlu0 %545
        %v548 = vperm.slane %v532, 1
        %v549 = vperm.slane %v533, 1
        %v550 = vmul.f32 %v546, %v548
        %v551 = vmul.f32 %v546, %v549
        %v552 = vadd.f32 %v542, %v550
        %v553 = vadd.f32 %v543, %v551
        %554 = vset.pattern.permute.xlu0 24
        %555 = vperm.xlu0 %554, %v193
        %v556 = vpop.permute.xlu0 %555
        %v558 = vperm.slane %v532, 2
        %v559 = vperm.slane %v533, 2
        %v560 = vmul.f32 %v556, %v558
        %v561 = vmul.f32 %v556, %v559
        %v562 = vadd.f32 %v552, %v560
        %v563 = vadd.f32 %v553, %v561
        %564 = vst [vmem:[#allocation1] ss:$2 sm:$0xff] %v192
        %v565 = vld.sshfl [vmem:[#allocation1] sm:$0xff pattern:$0x75316420]
        %v566 = vld.sshfl [vmem:[#allocation1 + $0x8] sm:$0xff pattern:$0x75316420]
        %567 = vrot.lane.b32.xlu0 %v565, 112
        %v568 = vpop.permute.xlu0 %567
        %569 = vrot.lane.b32.xlu0 %v566, 112
        %v570 = vpop.permute.xlu0 %569
        %vm571 = vcmask 916480
        %v572 = vsel %vm571, %v568, %v570
        %575 = vst [vmem:[#allocation1] ss:$2 sm:$0xff] %v192
        %v576 = vld.sshfl [vmem:[#allocation1] sm:$0xff pattern:$0x75316420]
        %577 = vrot.lane.b32.xlu0 %v576, 112
        %v578 = vpop.permute.xlu0 %577
        %v580 = vsel %vm571, %v570, %v578
        %v581 = vperm.slane %v194, 7
        %v582 = vperm.slane %v195, 7
        %v583 = vmul.f32 %v572, %v581
        %v584 = vmul.f32 %v580, %v582
        %585 = vset.pattern.permute.xlu0 7
        %586 = vperm.xlu0 %585, %v193
        %v587 = vpop.permute.xlu0 %586
        %v589 = vperm.slane %v583, 0
        %v590 = vperm.slane %v584, 0
        %v591 = vmul.f32 %v587, %v589
        %v592 = vmul.f32 %v587, %v590
        %v593 = vadd.f32 %v562, %v591
        %v594 = vadd.f32 %v563, %v592
        %595 = vset.pattern.permute.xlu0 16
        %596 = vperm.xlu0 %595, %v193
        %v597 = vpop.permute.xlu0 %596
        %v599 = vperm.slane %v583, 1
        %v600 = vperm.slane %v584, 1
        %v601 = vmul.f32 %v597, %v599
        %v602 = vmul.f32 %v597, %v600
        %v603 = vadd.f32 %v593, %v601
        %v604 = vadd.f32 %v594, %v602
        %605 = vset.pattern.permute.xlu0 25
        %606 = vperm.xlu0 %605, %v193
        %v607 = vpop.permute.xlu0 %606
        %v609 = vperm.slane %v583, 2
        %v610 = vperm.slane %v584, 2
        %v611 = vmul.f32 %v607, %v609
        %v612 = vmul.f32 %v607, %v610
        %v613 = vadd.f32 %v603, %v611
        %v614 = vadd.f32 %v604, %v612
        %615 = vst [vmem:[#allocation1] ss:$2 sm:$0xff] %v192
        %v616 = vld.sshfl [vmem:[#allocation1] sm:$0xff pattern:$0x75316420]
        %v617 = vld.sshfl [vmem:[#allocation1 + $0x8] sm:$0xff pattern:$0x75316420]
        %618 = vrot.lane.b32.xlu0 %v616, 111
        %v619 = vpop.permute.xlu0 %618
        %620 = vrot.lane.b32.xlu0 %v617, 111
        %v621 = vpop.permute.xlu0 %620
        %vm622 = vcmask 908288
        %v623 = vsel %vm622, %v619, %v621
        %626 = vst [vmem:[#allocation1] ss:$2 sm:$0xff] %v192
        %v627 = vld.sshfl [vmem:[#allocation1] sm:$0xff pattern:$0x75316420]
        %628 = vrot.lane.b32.xlu0 %v627, 111
        %v629 = vpop.permute.xlu0 %628
        %v631 = vsel %vm622, %v621, %v629
        %v632 = vperm.slane %v196, 0
        %v633 = vperm.slane %v197, 0
        %v634 = vmul.f32 %v623, %v632
        %v635 = vmul.f32 %v631, %v633
        %636 = vset.pattern.permute.xlu0 8
        %637 = vperm.xlu0 %636, %v193
        %v638 = vpop.permute.xlu0 %637
        %v640 = vperm.slane %v634, 0
        %v641 = vperm.slane %v635, 0
        %v642 = vmul.f32 %v638, %v640
        %v643 = vmul.f32 %v638, %v641
        %v644 = vadd.f32 %v613, %v642
        %v645 = vadd.f32 %v614, %v643
        %646 = vset.pattern.permute.xlu0 17
        %647 = vperm.xlu0 %646, %v193
        %v648 = vpop.permute.xlu0 %647
        %v650 = vperm.slane %v634, 1
        %v651 = vperm.slane %v635, 1
        %v652 = vmul.f32 %v648, %v650
        %v653 = vmul.f32 %v648, %v651
        %v654 = vadd.f32 %v644, %v652
        %v655 = vadd.f32 %v645, %v653
        %656 = vset.pattern.permute.xlu0 26
        %657 = vperm.xlu0 %656, %v193
        %v658 = vpop.permute.xlu0 %657
        %v660 = vperm.slane %v634, 2
        %v661 = vperm.slane %v635, 2
        %v662 = vmul.f32 %v658, %v660
        %v663 = vmul.f32 %v658, %v661
        %v664 = vadd.f32 %v654, %v662
        %v665 = vadd.f32 %v655, %v663
        %v666 = vmul.f32 %v664, 0.5
        %v667 = vmul.f32 %v665, 0.5
        %v668 = vmul.f32 %v664, 0.70710677
        %v669 = vmul.f32 %v665, 0.70710677
        %v670 = vmul.f32 %v668, %v668
        %v671 = vmin.f32 16.0, %v670
        %v672 = vmul.f32 %v671, 2.1237322e-06
        %v673 = vadd.f32 %v672, 0.00028619796
        %v674 = vmul.f32 %v671, %v673
        %v675 = vadd.f32 %v674, 0.0036580483
        %v676 = vmul.f32 %v671, %v675
        %v677 = vadd.f32 %v676, 0.05243302
        %v678 = vmul.f32 %v671, %v677
        %v679 = vadd.f32 %v678, 0.18741608
        %v680 = vmul.f32 %v671, %v679
        %v681 = vadd.f32 %v680, 1.1283791
        %v682 = vmul.f32 %v668, %v681
        %v683 = vmul.f32 %v671, 3.8918573e-05
        %v684 = vadd.f32 %v683, 0.001143296
        %v685 = vmul.f32 %v671, %v684
        %v686 = vadd.f32 %v685, 0.014752088
        %v687 = vmul.f32 %v671, %v686
        %v688 = vadd.f32 %v687, 0.112945676
        %v689 = vmul.f32 %v671, %v688
        %v690 = vadd.f32 %v689, 0.4994258
        %v691 = vmul.f32 %v671, %v690
        %v692 = vadd.f32 %v691, 1.0
        %v693 = vrcp.pop %v692
        %v694 = vmul.f32 %v692, %v693
        %v695 = vsub.f32 1.0, %v694
        %v696 = vmul.f32 %v693, %v695
        %v697 = vadd.f32 %v693, %v696
        %vm698 = vweird.f32 %v692
        %vm699 = vweird.f32 %v693
        %vm700 = vmor %vm698, %vm699
        %v701 = vsel %vm700, %v693, %v697
        %v702 = vand.u32 2147483647, %v692
        %vm703 = vcmp.eq.f32.partialorder %v702, 8.507059e+37
        %v704 = vand.u32 %v692, 2147483648
        %v705 = vor.u32 1.1754944e-38, %v704
        %v706 = vsel %vm703, %v705, %v701
        %v707 = vmul.f32 %v682, %v706
        %v708 = vmin.f32 %v707, 1.0
        %v709 = vmax.f32 %v708, -1.0
        %v710 = vmul.f32 %v669, %v669
        %v711 = vmin.f32 16.0, %v710
        %v712 = vmul.f32 %v711, 2.1237322e-06
        %v713 = vadd.f32 %v712, 0.00028619796
        %v714 = vmul.f32 %v711, %v713
        %v715 = vadd.f32 %v714, 0.0036580483
        %v716 = vmul.f32 %v711, %v715
        %v717 = vadd.f32 %v716, 0.05243302
        %v718 = vmul.f32 %v711, %v717
        %v719 = vadd.f32 %v718, 0.18741608
        %v720 = vmul.f32 %v711, %v719
        %v721 = vadd.f32 %v720, 1.1283791
        %v722 = vmul.f32 %v669, %v721
        %v723 = vmul.f32 %v711, 3.8918573e-05
        %v724 = vadd.f32 %v723, 0.001143296
        %v725 = vmul.f32 %v711, %v724
        %v726 = vadd.f32 %v725, 0.014752088
        %v727 = vmul.f32 %v711, %v726
        %v728 = vadd.f32 %v727, 0.112945676
        %v729 = vmul.f32 %v711, %v728
        %v730 = vadd.f32 %v729, 0.4994258
        %v731 = vmul.f32 %v711, %v730
        %v732 = vadd.f32 %v731, 1.0
        %v733 = vrcp.pop %v732
        %v734 = vmul.f32 %v732, %v733
        %v735 = vsub.f32 1.0, %v734
        %v736 = vmul.f32 %v733, %v735
        %v737 = vadd.f32 %v733, %v736
        %vm738 = vweird.f32 %v732
        %vm739 = vweird.f32 %v733
        %vm740 = vmor %vm738, %vm739
        %v741 = vsel %vm740, %v733, %v737
        %v742 = vand.u32 2147483647, %v732
        %vm743 = vcmp.eq.f32.partialorder %v742, 8.507059e+37
        %v744 = vand.u32 %v732, 2147483648
        %v745 = vor.u32 1.1754944e-38, %v744
        %v746 = vsel %vm743, %v745, %v741
        %v747 = vmul.f32 %v722, %v746
        %v748 = vmin.f32 %v747, 1.0
        %v749 = vmax.f32 %v748, -1.0
        %v750 = vadd.f32 %v709, 1.0
        %v751 = vadd.f32 %v749, 1.0
        %v752 = vmul.f32 %v666, %v750
        %v753 = vmul.f32 %v667, %v751
        %754 = vst [vmem:[%s186] sm:$0xff] %v752
        %755 = vst [vmem:[%s186 + $0x8] sm:$0xff] %v753
        %756 = vst [vmem:[%s186 + $0x10] sm:$0xff] %v664
        %757 = vst [vmem:[%s186 + $0x18] sm:$0xff] %v665
        %s758 = scalar_lea.vmem %s186, 32 [#allocation2]
        %759 = vst [vmem:[%s758] sm:$0xff] %v752
        %760 = vst [vmem:[%s758 + $0x8] sm:$0xff] %v753
        %761 = vst [vmem:[%s758 + $0x10] sm:$0xff] %v664
        %762 = vst [vmem:[%s758 + $0x18] sm:$0xff] %v665
        %s763 = scalar_lea.vmem %s186, 64 [#allocation2]
        %764 = vst [vmem:[%s763] sm:$0xff] %v752
        %765 = vst [vmem:[%s763 + $0x8] sm:$0xff] %v753
        %766 = vst [vmem:[%s763 + $0x10] sm:$0xff] %v664
        %767 = vst [vmem:[%s763 + $0x18] sm:$0xff] %v665
        %s768 = scalar_lea.vmem %s186, 96 [#allocation2]
        %769 = vst [vmem:[%s768] sm:$0xff] %v752
        %770 = vst [vmem:[%s768 + $0x8] sm:$0xff] %v753
        %771 = vst [vmem:[%s768 + $0x10] sm:$0xff] %v664
        %772 = vst [vmem:[%s768 + $0x18] sm:$0xff] %v665
        %s773 = sand.u32 %s112, 1
        %s774 = sand.u32 %s112, 1
        %s775 = smul.addr %s774, 128
        %s776 = scalar_lea.vmem [#allocation2], %s775
        // Predicated region
        $region37: #{model_forward.1} parent=35 // pred_check
          %p777 = pneg %p122
        $region38: #{model_forward.1} parent=35 // pred_check_branch
          %779 = sbr.rel (%p777) target = $region40
        $region39: #{model_forward.1} parent=35 // pred_region
          %s780 = smul.addr %s15, 4
          %s781 = smul.addr %s780, 8
          %s782 = scalar_lea.vmem %s4, %s781
          // Predicated region
          $region41: #{model_forward.1} parent=39 // pred_check
            _
          $region42: #{model_forward.1} parent=39 // pred_check_branch
            %784 = sbr.rel (0) target = $region44
          $region43: #{model_forward.1} parent=39 // pred_region
            // Predicated region
            $region45: #{model_forward.1} parent=43 // pred_check
              _
            $region46: #{model_forward.1} parent=43 // pred_check_branch
              %786 = sbr.rel (0) target = $region48
            $region47: #{model_forward.1} parent=43 // pred_region
              loop: start=0, step=1, limit=1
              $region49: #{model_forward.1} parent=47 // loop_pre_header
                _
              $region50: #{model_forward.1} parent=47 // loop_header
                %s788 = sphi 0, %s792
                %p789 = scmp.ge.s32.totalorder %s788, 1
                %s793 = sphi %s776, %s776
                %s794 = sphi %s782, %s782
              $region51: #{model_forward.1} parent=47 // loop_header_branch
                %791 = sbr.rel (%p789) target = $region55
              $region52: #{model_forward.1} parent=47 // loop_body
                %v795 = vld [vmem:[%s793] sm:$0xff]
                %796 = vst [vmem:[%s794] sm:$0xff] %v795
                %v797 = vld [vmem:[%s793 + $0x8] sm:$0xff]
                %798 = vst [vmem:[%s794 + $0x8] sm:$0xff] %v797
                %v799 = vld [vmem:[%s793 + $0x10] sm:$0xff]
                %800 = vst [vmem:[%s794 + $0x10] sm:$0xff] %v799
                %v801 = vld [vmem:[%s793 + $0x18] sm:$0xff]
                %802 = vst [vmem:[%s794 + $0x18] sm:$0xff] %v801
                %v803 = vld [vmem:[%s793 + $0x20] sm:$0xff]
                %804 = vst [vmem:[%s794 + $0x40] sm:$0xff] %v803
                %v805 = vld [vmem:[%s793 + $0x28] sm:$0xff]
                %806 = vst [vmem:[%s794 + $0x48] sm:$0xff] %v805
                %v807 = vld [vmem:[%s793 + $0x30] sm:$0xff]
                %808 = vst [vmem:[%s794 + $0x50] sm:$0xff] %v807
                %v809 = vld [vmem:[%s793 + $0x38] sm:$0xff]
                %810 = vst [vmem:[%s794 + $0x58] sm:$0xff] %v809
                %v811 = vld [vmem:[%s793 + $0x40] sm:$0xff]
                %812 = vst [vmem:[%s794 + $0x80] sm:$0xff] %v811
                %v813 = vld [vmem:[%s793 + $0x48] sm:$0xff]
                %814 = vst [vmem:[%s794 + $0x88] sm:$0xff] %v813
                %v815 = vld [vmem:[%s793 + $0x50] sm:$0xff]
                %816 = vst [vmem:[%s794 + $0x90] sm:$0xff] %v815
                %v817 = vld [vmem:[%s793 + $0x58] sm:$0xff]
                %818 = vst [vmem:[%s794 + $0x98] sm:$0xff] %v817
                %v819 = vld [vmem:[%s793 + $0x60] sm:$0xff]
                %820 = vst [vmem:[%s794 + $0xc0] sm:$0xff] %v819
                %v821 = vld [vmem:[%s793 + $0x68] sm:$0xff]
                %822 = vst [vmem:[%s794 + $0xc8] sm:$0xff] %v821
                %v823 = vld [vmem:[%s793 + $0x70] sm:$0xff]
                %824 = vst [vmem:[%s794 + $0xd0] sm:$0xff] %v823
                %v825 = vld [vmem:[%s793 + $0x78] sm:$0xff]
                %826 = vst [vmem:[%s794 + $0xd8] sm:$0xff] %v825
              $region53: #{model_forward.1} parent=47 // loop_footer
                %s792 = sadd.s32 1, %s788
              $region54: #{model_forward.1} parent=47 // loop_footer_branch
                %787 = sbr.rel target = $region50
              $region55: #{model_forward.1} parent=47 // loop_exit
                _
            $region48: #{model_forward.1} parent=43 // pred_fallthru
              _
            // Predicated region
            $region56: #{model_forward.1} parent=43 // pred_check
              _
            $region57: #{model_forward.1} parent=43 // pred_check_branch
              %828 = sbr.rel target = $region59
            $region58: #{model_forward.1} parent=43 // pred_region
              _
            $region59: #{model_forward.1} parent=43 // pred_fallthru
              _
          $region44: #{model_forward.1} parent=39 // pred_fallthru
            _
          %829 = vnop
        $region40: #{model_forward.1} parent=35 // pred_fallthru
          _
      $region36: #{model_forward.1} parent=5 // pred_fallthru
        _
      %p830 = scmp.le.s32.totalorder 2, %s10
      // Predicated region
      $region60: #{model_forward.1} parent=5 // pred_check
        %p831 = pneg %p830
      $region61: #{model_forward.1} parent=5 // pred_check_branch
        %833 = sbr.rel (%p831) target = $region63
      $region62: #{model_forward.1} parent=5 // pred_region
        %s834 = ssub.s32 %s10, 2
        // Predicated region
        $region64: #{model_forward.1} parent=62 // pred_check
          %p835 = pneg %p128
        $region65: #{model_forward.1} parent=62 // pred_check_branch
          %837 = sbr.rel (%p835) target = $region67
        $region66: #{model_forward.1} parent=62 // pred_region
          %s838 = sand.u32 %s113, 1
          %s839 = sand.u32 %s113, 1
          %s840 = smul.addr %s839, 128
          %s841 = scalar_lea.vmem [#allocation2], %s840
        $region67: #{model_forward.1} parent=62 // pred_fallthru
          _
      $region63: #{model_forward.1} parent=5 // pred_fallthru
        _
    $region6: #{model_forward.1} parent=1 // loop_footer
      %s14 = sadd.s32 1, %s10
    $region7: #{model_forward.1} parent=1 // loop_footer_branch
      %9 = sbr.rel target = $region3
    $region8: #{model_forward.1} parent=1 // loop_exit
      _

</llo_original>
